<compile_context>
chip_gen: v5e
topology: v5e:2x2
jax: 0.10.0
libtpu: 0.0.40
codegen_flags: <defaults>
</compile_context>

<pallas_src>
import functools

import jax
import jax.numpy as jnp
from jax.experimental import pallas as pl
from jax.experimental.pallas import tpu as pltpu

INPUT_DIM = 285
H1, H2 = 128, 64
OUTPUT_DIM = 2
LEAKY_SLOPE = 0.01        # torch default negative_slope for nn.LeakyReLU

# Batch tile (rows per grid step) upper bound.  f32 x ingest -> multiple of 8.
#   v5e (16 MiB scoped default, ~0.82 TB/s): 4096 is the sweet spot.
#   v6e (128 MiB physical, 1.4 TB/s): 8192 also fine; 4096 is safe everywhere.
#   v7x (64 MiB per-TC VMEM, 3.2 TB/s): 4096-8192; re-derive VMEM before going bigger.
DEFAULT_BLOCK_B = 4096


def _round_up(n, m):
    return ((n + m - 1) // m) * m


def _leaky_relu(x):
    return jnp.where(x > 0, x, LEAKY_SLOPE * x)


def intercropping_mlp_kernel(x_ref, w1_ref, b1_ref, w2_ref, b2_ref,
                             wo_ref, bo_ref, o_ref):
    # x arrives f32 straight from HBM (single read of the dominant operand);
    # cast to bf16 in-kernel (VPU slack), matmul unpadded with K=285.
    x = x_ref[...].astype(jnp.bfloat16)                               # (TB, 285)

    # Hidden layer 1: 285 -> 128, LeakyReLU. bf16 operands, f32 accumulation.
    h = jnp.dot(x, w1_ref[...], preferred_element_type=jnp.float32) + b1_ref[...]
    h = _leaky_relu(h)                                                # (TB, 128) f32

    # Hidden layer 2: 128 -> 64, LeakyReLU.
    h = jnp.dot(h.astype(jnp.bfloat16), w2_ref[...],
                preferred_element_type=jnp.float32) + b2_ref[...]
    h = _leaky_relu(h)                                                # (TB, 64) f32

    # Output layer 64 -> 2 as an N=2 MXU matmul (MXU is nearly idle here;
    # keeps the XLU/VPU free so the kernel stays DMA-bound).
    y = jnp.dot(h.astype(jnp.bfloat16), wo_ref[...],
                preferred_element_type=jnp.float32) + bo_ref[...]     # (TB, 2)

    # PositiveLogPlusOne: clamp(min=-0.99999) -> log1p -> relu.
    # (Clamp also guards padded rows of the last partial tile against NaNs.)
    y = jnp.maximum(y, -0.99999)
    y = jnp.maximum(jnp.log1p(y), 0.0)

    o_ref[...] = y.astype(o_ref.dtype)


def prepare_params(raw_params):
    """One-time parameter conversion (do NOT call per forward pass).

    raw params (torch-style): w1 (285,128) f32, b1 (1,128), w2 (128,64), b2 (1,64),
                              wo (2,64) f32 [out, in], bo (1,2).
    kernel params: bf16 weights, Wout transposed to (64, 2), f32 biases.
    """
    w1, b1, w2, b2, wo, bo = raw_params
    return (w1.astype(jnp.bfloat16), b1,
            w2.astype(jnp.bfloat16), b2,
            wo.T.astype(jnp.bfloat16),          # (64, 2)
            bo)


@functools.partial(jax.jit, static_argnames=("block_b",))
def intercropping_mlp_forward(x, prepared_params, *, block_b=DEFAULT_BLOCK_B):
    """x: (B, 285) f32 -> (B, 2) f32.  prepared_params from prepare_params()."""
    assert block_b % 8 == 0, "block_b must be a multiple of 8 (f32 sublane tile)"
    w1, b1, w2, b2, wo_t, bo = prepared_params
    B = x.shape[0]

    # Batch tile: cap at block_b, keep >=2 grid steps for mid/large batches so
    # the parallel batch axis shards across both TensorCores on v7x megacore,
    # and never exceed the (8-aligned) batch itself for tiny batches.
    tb = min(block_b, _round_up(pl.cdiv(B, 2), 512), _round_up(B, 8))
    grid = (pl.cdiv(B, tb),)

    const = lambda i: (0, 0)   # weights/biases stay resident across grid steps

    # VMEM budget derived from the tile: 2x double-buffered x tile + out tile
    # + f32/bf16 intermediates + resident weights + slack.  Clamped to a range
    # that is safe for v7x's 64 MiB per-TC VMEM.
    per_row = (INPUT_DIM * 4) * 2 + (OUTPUT_DIM * 4) * 2 \
              + INPUT_DIM * 2 + H1 * (4 + 2) + H2 * (4 + 2) + OUTPUT_DIM * 4
    vmem_bytes = int(1.5 * (tb * per_row + (1 << 20)))
    vmem_bytes = max(32 << 20, min(vmem_bytes, 56 << 20))

    cost = pl.CostEstimate(
        flops=2 * B * (INPUT_DIM * H1 + H1 * H2 + H2 * OUTPUT_DIM),
        transcendentals=B * OUTPUT_DIM,
        bytes_accessed=(B * INPUT_DIM * 4 + B * OUTPUT_DIM * 4
                        + INPUT_DIM * H1 * 2 + H1 * H2 * 2 + H2 * OUTPUT_DIM * 2
                        + (H1 + H2 + OUTPUT_DIM) * 4),
    )

    return pl.pallas_call(
        intercropping_mlp_kernel,
        out_shape=jax.ShapeDtypeStruct((B, OUTPUT_DIM), jnp.float32),
        grid=grid,
        in_specs=[
            pl.BlockSpec((tb, INPUT_DIM), lambda i: (i, 0)),   # x tile (pipelined, f32)
            pl.BlockSpec((INPUT_DIM, H1), const),              # W1 bf16 (resident)
            pl.BlockSpec((1, H1), const),                      # b1 f32
            pl.BlockSpec((H1, H2), const),                     # W2 bf16
            pl.BlockSpec((1, H2), const),                      # b2 f32
            pl.BlockSpec((H2, OUTPUT_DIM), const),             # Wout^T (64, 2) bf16
            pl.BlockSpec((1, OUTPUT_DIM), const),              # bout f32
        ],
        out_specs=pl.BlockSpec((tb, OUTPUT_DIM), lambda i: (i, 0)),
        compiler_params=pltpu.CompilerParams(
            dimension_semantics=("parallel",),
            vmem_limit_bytes=vmem_bytes,
        ),
        cost_estimate=cost,
    )(x, w1, b1, w2, b2, wo_t, bo)


def init_params(key):
    """Kaiming-normal-style init (fan_in), zero biases — matches init_weights()."""
    k1, k2, k3 = jax.random.split(key, 3)

    def kaiming(k, fan_in, fan_out):
        std = (2.0 / fan_in) ** 0.5
        return jax.random.normal(k, (fan_in, fan_out), jnp.float32) * std

    w1 = kaiming(k1, INPUT_DIM, H1)                    # (285, 128), y = x @ W1
    b1 = jnp.zeros((1, H1), jnp.float32)
    w2 = kaiming(k2, H1, H2)                           # (128, 64)
    b2 = jnp.zeros((1, H2), jnp.float32)
    wo = kaiming(k3, H2, OUTPUT_DIM).T                 # stored (2, 64) = torch layout
    bo = jnp.zeros((1, OUTPUT_DIM), jnp.float32)
    return (w1, b1, w2, b2, wo, bo)


def reference_forward(x, raw_params):
    """Pure-JAX reference replicating the kernel's bf16 quantization points."""
    w1, b1, w2, b2, wo, bo = raw_params
    q = lambda a: a.astype(jnp.bfloat16).astype(jnp.float32)

    h = _leaky_relu(jnp.dot(q(x), q(w1), precision=jax.lax.Precision.HIGHEST) + b1)
    h = _leaky_relu(jnp.dot(q(h), q(w2), precision=jax.lax.Precision.HIGHEST) + b2)
    y = jnp.dot(q(h), q(wo.T), precision=jax.lax.Precision.HIGHEST) + bo
    y = jnp.maximum(y, -0.99999)
    return jnp.maximum(jnp.log1p(y), 0.0)


if __name__ == "__main__":
    key = jax.random.PRNGKey(0)
    k_params, k_x = jax.random.split(key)

    B = 8
    raw_params = init_params(k_params)
    params = prepare_params(raw_params)          # one-time conversion
    x = jax.random.normal(k_x, (B, INPUT_DIM), jnp.float32)

    out = intercropping_mlp_forward(x, params)
    out = jax.block_until_ready(out)

    ref = reference_forward(x, raw_params)
    assert out.shape == (B, OUTPUT_DIM), out.shape
    assert jnp.allclose(out, ref, atol=1e-3, rtol=1e-3), (out, ref)

    print("KERNEL_OK")
</pallas_src>

<mosaic_0001>
module attributes {stable_mosaic.version = 11 : i64} {
  func.func @intercropping_mlp_kernel(%arg0: i32, %arg1: memref<8x285xf32, #tpu.memory_space<vmem>>, %arg2: memref<285x128xbf16, #tpu.memory_space<vmem>>, %arg3: memref<1x128xf32, #tpu.memory_space<vmem>>, %arg4: memref<128x64xbf16, #tpu.memory_space<vmem>>, %arg5: memref<1x64xf32, #tpu.memory_space<vmem>>, %arg6: memref<64x2xbf16, #tpu.memory_space<vmem>>, %arg7: memref<1x2xf32, #tpu.memory_space<vmem>>, %arg8: memref<8x2xf32, #tpu.memory_space<vmem>>) attributes {dimension_semantics = [#tpu.dimension_semantics<parallel>], iteration_bounds = array<i64: 1>, scalar_prefetch = 0 : i64, scratch_operands = 0 : i64, tpu.core_type = #tpu.core_type<tc>, window_params = [{transform_indices = @transform_0, window_bounds = array<i64: 8, 285>}, {pipeline_mode = #tpu.pipeline_mode<synchronous>, transform_indices = @transform_1, window_bounds = array<i64: 285, 128>}, {pipeline_mode = #tpu.pipeline_mode<synchronous>, transform_indices = @transform_2, window_bounds = array<i64: 1, 128>}, {pipeline_mode = #tpu.pipeline_mode<synchronous>, transform_indices = @transform_3, window_bounds = array<i64: 128, 64>}, {pipeline_mode = #tpu.pipeline_mode<synchronous>, transform_indices = @transform_4, window_bounds = array<i64: 1, 64>}, {pipeline_mode = #tpu.pipeline_mode<synchronous>, transform_indices = @transform_5, window_bounds = array<i64: 64, 2>}, {pipeline_mode = #tpu.pipeline_mode<synchronous>, transform_indices = @transform_6, window_bounds = array<i64: 1, 2>}, {transform_indices = @transform_7, window_bounds = array<i64: 8, 2>}]} {
    %c0 = arith.constant 0 : index
    %c0_0 = arith.constant 0 : index
    %0 = vector.load %arg1[%c0, %c0_0] : memref<8x285xf32, #tpu.memory_space<vmem>>, vector<8x285xf32>
    %1 = arith.truncf %0 : vector<8x285xf32> to vector<8x285xbf16>
    %c0_1 = arith.constant 0 : index
    %c0_2 = arith.constant 0 : index
    %2 = vector.load %arg2[%c0_1, %c0_2] : memref<285x128xbf16, #tpu.memory_space<vmem>>, vector<285x128xbf16>
    %cst = arith.constant dense<0.000000e+00> : vector<8x128xf32>
    %3 = tpu.matmul %1, %2, %cst {dimension_numbers = #tpu.dot_dimension_numbers<[1], [0], [0], [1], [0, 0, 1, 1], [], []>} : vector<8x285xbf16>, vector<285x128xbf16>, vector<8x128xf32> -> vector<8x128xf32>
    %c0_3 = arith.constant 0 : index
    %c0_4 = arith.constant 0 : index
    %4 = vector.load %arg3[%c0_3, %c0_4] : memref<1x128xf32, #tpu.memory_space<vmem>>, vector<1x128xf32>
    %5 = vector.broadcast %4 : vector<1x128xf32> to vector<8x128xf32>
    %6 = arith.addf %3, %5 : vector<8x128xf32>
    %cst_5 = arith.constant 0.000000e+00 : f32
    %7 = vector.broadcast %cst_5 : f32 to vector<8x128xf32>
    %8 = arith.cmpf ogt, %6, %7 : vector<8x128xf32>
    %cst_6 = arith.constant 0.00999999977 : f32
    %9 = vector.broadcast %cst_6 : f32 to vector<8x128xf32>
    %10 = arith.mulf %9, %6 : vector<8x128xf32>
    %11 = arith.select %8, %6, %10 : vector<8x128xi1>, vector<8x128xf32>
    %12 = arith.truncf %11 : vector<8x128xf32> to vector<8x128xbf16>
    %c0_7 = arith.constant 0 : index
    %c0_8 = arith.constant 0 : index
    %13 = vector.load %arg4[%c0_7, %c0_8] : memref<128x64xbf16, #tpu.memory_space<vmem>>, vector<128x64xbf16>
    %cst_9 = arith.constant dense<0.000000e+00> : vector<8x64xf32>
    %14 = tpu.matmul %12, %13, %cst_9 {dimension_numbers = #tpu.dot_dimension_numbers<[1], [0], [0], [1], [0, 0, 1, 1], [], []>} : vector<8x128xbf16>, vector<128x64xbf16>, vector<8x64xf32> -> vector<8x64xf32>
    %c0_10 = arith.constant 0 : index
    %c0_11 = arith.constant 0 : index
    %15 = vector.load %arg5[%c0_10, %c0_11] : memref<1x64xf32, #tpu.memory_space<vmem>>, vector<1x64xf32>
    %16 = vector.broadcast %15 : vector<1x64xf32> to vector<8x64xf32>
    %17 = arith.addf %14, %16 : vector<8x64xf32>
    %cst_12 = arith.constant 0.000000e+00 : f32
    %18 = vector.broadcast %cst_12 : f32 to vector<8x64xf32>
    %19 = arith.cmpf ogt, %17, %18 : vector<8x64xf32>
    %cst_13 = arith.constant 0.00999999977 : f32
    %20 = vector.broadcast %cst_13 : f32 to vector<8x64xf32>
    %21 = arith.mulf %20, %17 : vector<8x64xf32>
    %22 = arith.select %19, %17, %21 : vector<8x64xi1>, vector<8x64xf32>
    %23 = arith.truncf %22 : vector<8x64xf32> to vector<8x64xbf16>
    %c0_14 = arith.constant 0 : index
    %c0_15 = arith.constant 0 : index
    %24 = vector.load %arg6[%c0_14, %c0_15] : memref<64x2xbf16, #tpu.memory_space<vmem>>, vector<64x2xbf16>
    %cst_16 = arith.constant dense<0.000000e+00> : vector<8x2xf32>
    %25 = tpu.matmul %23, %24, %cst_16 {dimension_numbers = #tpu.dot_dimension_numbers<[1], [0], [0], [1], [0, 0, 1, 1], [], []>} : vector<8x64xbf16>, vector<64x2xbf16>, vector<8x2xf32> -> vector<8x2xf32>
    %c0_17 = arith.constant 0 : index
    %c0_18 = arith.constant 0 : index
    %26 = vector.load %arg7[%c0_17, %c0_18] : memref<1x2xf32, #tpu.memory_space<vmem>>, vector<1x2xf32>
    %27 = vector.broadcast %26 : vector<1x2xf32> to vector<8x2xf32>
    %28 = arith.addf %25, %27 : vector<8x2xf32>
    %cst_19 = arith.constant -0.999989986 : f32
    %29 = vector.broadcast %cst_19 : f32 to vector<8x2xf32>
    %30 = arith.maximumf %28, %29 : vector<8x2xf32>
    %31 = math.log1p %30 : vector<8x2xf32>
    %cst_20 = arith.constant 0.000000e+00 : f32
    %32 = vector.broadcast %cst_20 : f32 to vector<8x2xf32>
    %33 = arith.maximumf %31, %32 : vector<8x2xf32>
    %c0_21 = arith.constant 0 : index
    %c0_22 = arith.constant 0 : index
    %34 = vector.load %arg8[%c0_21, %c0_22] : memref<8x2xf32, #tpu.memory_space<vmem>>, vector<8x2xf32>
    tpu.vector_store %arg8[%c0_21, %c0_22], %33 {strides = array<i32>} : memref<8x2xf32, #tpu.memory_space<vmem>>, vector<8x2xf32>,
    return
  }
  func.func @transform_0(%arg0: i32) -> (i32, i32) {
    %c0_i32 = arith.constant 0 : i32
    %c0_i32_0 = arith.constant 0 : i32
    return %arg0, %c0_i32 : i32, i32
  }
  func.func @transform_1(%arg0: i32) -> (i32, i32) {
    %c0_i32 = arith.constant 0 : i32
    %c0_i32_0 = arith.constant 0 : i32
    %c0_i32_1 = arith.constant 0 : i32
    return %c0_i32, %c0_i32_0 : i32, i32
  }
  func.func @transform_2(%arg0: i32) -> (i32, i32) {
    %c0_i32 = arith.constant 0 : i32
    %c0_i32_0 = arith.constant 0 : i32
    %c0_i32_1 = arith.constant 0 : i32
    return %c0_i32, %c0_i32_0 : i32, i32
  }
  func.func @transform_3(%arg0: i32) -> (i32, i32) {
    %c0_i32 = arith.constant 0 : i32
    %c0_i32_0 = arith.constant 0 : i32
    %c0_i32_1 = arith.constant 0 : i32
    return %c0_i32, %c0_i32_0 : i32, i32
  }
  func.func @transform_4(%arg0: i32) -> (i32, i32) {
    %c0_i32 = arith.constant 0 : i32
    %c0_i32_0 = arith.constant 0 : i32
    %c0_i32_1 = arith.constant 0 : i32
    return %c0_i32, %c0_i32_0 : i32, i32
  }
  func.func @transform_5(%arg0: i32) -> (i32, i32) {
    %c0_i32 = arith.constant 0 : i32
    %c0_i32_0 = arith.constant 0 : i32
    %c0_i32_1 = arith.constant 0 : i32
    return %c0_i32, %c0_i32_0 : i32, i32
  }
  func.func @transform_6(%arg0: i32) -> (i32, i32) {
    %c0_i32 = arith.constant 0 : i32
    %c0_i32_0 = arith.constant 0 : i32
    %c0_i32_1 = arith.constant 0 : i32
    return %c0_i32, %c0_i32_0 : i32, i32
  }
  func.func @transform_7(%arg0: i32) -> (i32, i32) {
    %c0_i32 = arith.constant 0 : i32
    %c0_i32_0 = arith.constant 0 : i32
    return %arg0, %c0_i32 : i32, i32
  }
}

</mosaic_0001>

<llo_original>
// kernel: intercropping_mlp_forward.1
$region0: #{intercropping_mlp_forward.1}
  #allocation0 [shape = 'u32[]', space=smem, size = 0x4, offset = 0x4, fixed_abs, tag = 'smem constant byte address 0x4 - core index']
  #allocation1 [shape = 'u32[72,128]{1,0:T(1,128)}', space=vmem, size = 0x9000, scoped, tag = 'internal scratch']
  %s0 = inlined_call_operand.vmem [shape: f32[8,285], index: 0, kind: input, shape index: {}]
  %s1 = inlined_call_operand.hbm [shape: bf16[285,128], index: 1, kind: input, shape index: {}]
  %s2 = inlined_call_operand.vmem [shape: f32[1,128], index: 2, kind: input, shape index: {}]
  %s3 = inlined_call_operand.vmem [shape: bf16[128,64], index: 3, kind: input, shape index: {}]
  %s4 = inlined_call_operand.vmem [shape: f32[1,64], index: 4, kind: input, shape index: {}]
  %s5 = inlined_call_operand.vmem [shape: bf16[64,2], index: 5, kind: input, shape index: {}]
  %s6 = inlined_call_operand.vmem [shape: f32[1,2], index: 6, kind: input, shape index: {}]
  %s7 = inlined_call_operand.vmem [shape: f32[8,2], index: 7, kind: output, shape index: {}]
  %s8 = sld [smem:[#allocation0]]
  $region42: #{intercropping_mlp_forward.1} parent=0
    _
  %s10 = ssub.s32 1, %s8
  %s11 = scalar_select 0, %s10, %s8
  $region1: #{intercropping_mlp_forward.1} parent=0
    #allocation2 [shape = 'u8[73728]{0}', space=vmem, size = 0x12000, scoped, tag = 'input window, operand 1, single buffered']
    #allocation3 [shape = 's32[1]{0}', space=sflag, size = 0x4, scoped, tag = 'scoped memory for intercropping_mlp_forward.1']
    %12 = vsyncpa [#allocation3], 0
    // Predicated region
    $region2: #{intercropping_mlp_forward.1} parent=1 // pred_check
      _
    $region3: #{intercropping_mlp_forward.1} parent=1 // pred_check_branch
      %14 = sbr.rel (0) target = $region5
    $region4: #{intercropping_mlp_forward.1} parent=1 // pred_region
      _
    $region5: #{intercropping_mlp_forward.1} parent=1 // pred_fallthru
      _
    // Predicated region
    $region6: #{intercropping_mlp_forward.1} parent=1 // pred_check
      _
    $region7: #{intercropping_mlp_forward.1} parent=1 // pred_check_branch
      %16 = sbr.rel (0) target = $region9
    $region8: #{intercropping_mlp_forward.1} parent=1 // pred_region
      %18 = vsyncadd [#allocation3], 0
      %s19 = sshll.u32 %s1, 4
      %s20 = int_to_ptr.hbm [resolvable:$true] %s19
      %s21 = sshll.u32 [#allocation2], 4
      %s22 = int_to_ptr.vmem [resolvable:$true] %s21
      %27 = dma.hbm_to_vmem [thread:$0]  %s20, 2304, %s22, [#allocation3], 64, 64, 4
    $region9: #{intercropping_mlp_forward.1} parent=1 // pred_fallthru
      _
    // Predicated region
    $region10: #{intercropping_mlp_forward.1} parent=1 // pred_check
      _
    $region11: #{intercropping_mlp_forward.1} parent=1 // pred_check_branch
      %29 = sbr.rel (0) target = $region13
    $region12: #{intercropping_mlp_forward.1} parent=1 // pred_region
      _
    $region13: #{intercropping_mlp_forward.1} parent=1 // pred_fallthru
      _
    // Predicated region
    $region14: #{intercropping_mlp_forward.1} parent=1 // pred_check
      _
    $region15: #{intercropping_mlp_forward.1} parent=1 // pred_check_branch
      %31 = sbr.rel (0) target = $region17
    $region16: #{intercropping_mlp_forward.1} parent=1 // pred_region
      _
    $region17: #{intercropping_mlp_forward.1} parent=1 // pred_fallthru
      _
    // Predicated region
    $region18: #{intercropping_mlp_forward.1} parent=1 // pred_check
      _
    $region19: #{intercropping_mlp_forward.1} parent=1 // pred_check_branch
      %33 = sbr.rel (0) target = $region21
    $region20: #{intercropping_mlp_forward.1} parent=1 // pred_region
      _
    $region21: #{intercropping_mlp_forward.1} parent=1 // pred_fallthru
      _
    // Predicated region
    $region22: #{intercropping_mlp_forward.1} parent=1 // pred_check
      _
    $region23: #{intercropping_mlp_forward.1} parent=1 // pred_check_branch
      %35 = sbr.rel (0) target = $region25
    $region24: #{intercropping_mlp_forward.1} parent=1 // pred_region
      _
    $region25: #{intercropping_mlp_forward.1} parent=1 // pred_fallthru
      _
    // Predicated region
    $region26: #{intercropping_mlp_forward.1} parent=1 // pred_check
      _
    $region27: #{intercropping_mlp_forward.1} parent=1 // pred_check_branch
      %37 = sbr.rel (0) target = $region29
    $region28: #{intercropping_mlp_forward.1} parent=1 // pred_region
      _
    $region29: #{intercropping_mlp_forward.1} parent=1 // pred_fallthru
      _
    // Predicated region
    $region30: #{intercropping_mlp_forward.1} parent=1 // pred_check
      _
    $region31: #{intercropping_mlp_forward.1} parent=1 // pred_check_branch
      %39 = sbr.rel (0) target = $region33
    $region32: #{intercropping_mlp_forward.1} parent=1 // pred_region
      %41 = dma.done [#allocation3], 2304
    $region33: #{intercropping_mlp_forward.1} parent=1 // pred_fallthru
      _
    %v43 = vld [vmem:[%s0] sm:$0xff]
    %v44 = vld [vmem:[%s0 + $0x8] sm:$0xff]
    %v45 = vld [vmem:[%s0 + $0x10] sm:$0xff]
    %v46 = vpack.c.bf16 %v43, %v43
    %v47 = vpack.c.bf16 %v44, %v44
    %v48 = vpack.c.bf16 %v45, %v45
    %v49 = vld [vmem:[#allocation2] sm:$0xf]
    %v50 = vld [vmem:[#allocation2 + $0x4] sm:$0xf]
    %v51 = vld [vmem:[#allocation2 + $0x8] sm:$0xf]
    %v52 = vld [vmem:[#allocation2 + $0xc] sm:$0xf]
    %v53 = vld [vmem:[#allocation2 + $0x10] sm:$0xf]
    %v54 = vld [vmem:[#allocation2 + $0x14] sm:$0xf]
    %v55 = vld [vmem:[#allocation2 + $0x18] sm:$0xf]
    %v56 = vld [vmem:[#allocation2 + $0x1c] sm:$0xf]
    %v57 = vld [vmem:[#allocation2 + $0x20] sm:$0xf]
    %v58 = vld [vmem:[#allocation2 + $0x24] sm:$0xf]
    %v59 = vld [vmem:[#allocation2 + $0x28] sm:$0xf]
    %v60 = vld [vmem:[#allocation2 + $0x2c] sm:$0xf]
    %v61 = vld [vmem:[#allocation2 + $0x30] sm:$0xf]
    %v62 = vld [vmem:[#allocation2 + $0x34] sm:$0xf]
    %v63 = vld [vmem:[#allocation2 + $0x38] sm:$0xf]
    %v64 = vld [vmem:[#allocation2 + $0x3c] sm:$0xf]
    %v65 = vld [vmem:[#allocation2 + $0x40] sm:$0xf]
    %v66 = vld [vmem:[#allocation2 + $0x44] sm:$0xf]
    %v67 = vld [vmem:[#allocation2 + $0x48] sm:$0xf]
    %v68 = vld [vmem:[#allocation2 + $0x4c] sm:$0xf]
    %v69 = vld [vmem:[#allocation2 + $0x50] sm:$0xf]
    %v70 = vld [vmem:[#allocation2 + $0x54] sm:$0xf]
    %v71 = vld [vmem:[#allocation2 + $0x58] sm:$0xf]
    %v72 = vld [vmem:[#allocation2 + $0x5c] sm:$0xf]
    %v73 = vld [vmem:[#allocation2 + $0x60] sm:$0xf]
    %v74 = vld [vmem:[#allocation2 + $0x64] sm:$0xf]
    %v75 = vld [vmem:[#allocation2 + $0x68] sm:$0xf]
    %v76 = vld [vmem:[#allocation2 + $0x6c] sm:$0xf]
    %v77 = vld [vmem:[#allocation2 + $0x70] sm:$0xf]
    %v78 = vld [vmem:[#allocation2 + $0x74] sm:$0xf]
    %v79 = vld [vmem:[#allocation2 + $0x78] sm:$0xf]
    %v80 = vld [vmem:[#allocation2 + $0x7c] sm:$0xf]
    %v81 = vld [vmem:[#allocation2 + $0x80] sm:$0xf]
    %v82 = vld [vmem:[#allocation2 + $0x84] sm:$0xf]
    %v83 = vld [vmem:[#allocation2 + $0x88] sm:$0xf]
    %v84 = vld [vmem:[#allocation2 + $0x8c] sm:$0x7]
    %v85 = vld [vmem:[%s2] sm:$0x1]
    %v87 = vperm.slane %v85, 0
    %v125 = vunpack.c.l.b16 %v49
    %v126 = vunpack.c.l.b16 %v50
    %v127 = vunpack.c.l.b16 %v51
    %v128 = vunpack.c.l.b16 %v52
    %v129 = vunpack.c.l.b16 %v53
    %v130 = vunpack.c.l.b16 %v54
    %v131 = vunpack.c.l.b16 %v55
    %v132 = vunpack.c.l.b16 %v56
    %v133 = vunpack.c.l.b16 %v57
    %v134 = vunpack.c.l.b16 %v58
    %v135 = vunpack.c.l.b16 %v59
    %v136 = vunpack.c.l.b16 %v60
    %v137 = vunpack.c.l.b16 %v61
    %v138 = vunpack.c.l.b16 %v62
    %v139 = vunpack.c.l.b16 %v63
    %v140 = vunpack.c.l.b16 %v64
    %v141 = vunpack.c.l.b16 %v65
    %v142 = vunpack.c.l.b16 %v66
    %v143 = vunpack.c.l.b16 %v67
    %v144 = vunpack.c.l.b16 %v68
    %v145 = vunpack.c.l.b16 %v69
    %v146 = vunpack.c.l.b16 %v70
    %v147 = vunpack.c.l.b16 %v71
    %v148 = vunpack.c.l.b16 %v72
    %v149 = vunpack.c.l.b16 %v73
    %v150 = vunpack.c.l.b16 %v74
    %v151 = vunpack.c.l.b16 %v75
    %v152 = vunpack.c.l.b16 %v76
    %v153 = vunpack.c.l.b16 %v77
    %v154 = vunpack.c.l.b16 %v78
    %v155 = vunpack.c.l.b16 %v79
    %v156 = vunpack.c.l.b16 %v80
    %v157 = vunpack.c.l.b16 %v81
    %v158 = vunpack.c.l.b16 %v82
    %v159 = vunpack.c.l.b16 %v83
    %v160 = vunpack.c.l.b16 %v84
    %v161 = vpack.c.b16 %v126, %v125
    %v162 = vpack.c.b16 %v128, %v127
    %v163 = vpack.c.b16 %v130, %v129
    %v164 = vpack.c.b16 %v132, %v131
    %v165 = vpack.c.b16 %v134, %v133
    %v166 = vpack.c.b16 %v136, %v135
    %v167 = vpack.c.b16 %v138, %v137
    %v168 = vpack.c.b16 %v140, %v139
    %v169 = vpack.c.b16 %v142, %v141
    %v170 = vpack.c.b16 %v144, %v143
    %v171 = vpack.c.b16 %v146, %v145
    %v172 = vpack.c.b16 %v148, %v147
    %v173 = vpack.c.b16 %v150, %v149
    %v174 = vpack.c.b16 %v152, %v151
    %v175 = vpack.c.b16 %v154, %v153
    %v176 = vpack.c.b16 %v156, %v155
    %v177 = vpack.c.b16 %v158, %v157
    %v178 = vpack.c.b16 %v160, %v159
    %vm196 = vcmask 236544
    %v198 = vsel %vm196, %v48, 0
    %vm200 = vcmask 1045504
    %vm201 = vcmask 1046528
    %v202 = vsel %vm200, 4294967295, 65535
    %v203 = vsel %vm201, %v202, 0
    %v205 = vand.u32 %v178, %v203
    %207 = vmatpush.bf16.msra.mxu0 %v168
    %208 = vmatpush.bf16.msra.mxu0 %v167
    %209 = vmatpush.bf16.msra.mxu0 %v166
    %210 = vmatpush.bf16.msra.mxu0 %v165
    %211 = vmatpush.bf16.msra.mxu0 %v164
    %212 = vmatpush.bf16.msra.mxu0 %v163
    %213 = vmatpush.bf16.msra.mxu0 %v162
    %214 = vmatpush.bf16.msra.mxu0 %v161
    %215 = vmatmul.bf16.gmra.mxu0 %v46
    %v216 = vpop.f32.mrf.mxu0
    %v217 = vadd.f32 %v87, %v216
    %v218 = vpop.f32.mrf.mxu0
    %219 = vdwg.mxu0
    %220 = vmatpush.bf16.msra.mxu0 %v176
    %221 = vmatpush.bf16.msra.mxu0 %v175
    %222 = vmatpush.bf16.msra.mxu0 %v174
    %223 = vmatpush.bf16.msra.mxu0 %v173
    %224 = vmatpush.bf16.msra.mxu0 %v172
    %225 = vmatpush.bf16.msra.mxu0 %v171
    %226 = vmatpush.bf16.msra.mxu0 %v170
    %227 = vmatpush.bf16.msra.mxu0 %v169
    %228 = vmatmul.bf16.gmra.mxu0 %v47
    %v229 = vpop.f32.mrf.mxu0
    %v230 = vadd.f32 %v217, %v229
    %v231 = vpop.f32.mrf.mxu0
    %232 = vdwg.mxu0
    %233 = vmatpush.bf16.msra.mxu0 0
    %234 = vmatpush.bf16.msra.mxu0 0
    %235 = vmatpush.bf16.msra.mxu0 0
    %236 = vmatpush.bf16.msra.mxu0 0
    %237 = vmatpush.bf16.msra.mxu0 0
    %238 = vmatpush.bf16.msra.mxu0 0
    %239 = vmatpush.bf16.msra.mxu0 %v205
    %240 = vmatpush.bf16.msra.mxu0 %v177
    %241 = vmatmul.bf16.gmra.mxu0 %v198
    %v242 = vpop.f32.mrf.mxu0
    %v243 = vadd.f32 %v230, %v242
    %v244 = vpop.f32.mrf.mxu0
    %245 = vdwg.mxu0
    %vm246 = vcmp.gt.f32.partialorder %v243, 0.0
    %v247 = vmul.f32 %v243, 0.01
    %v248 = vsel %vm246, %v243, %v247
    %v249 = vpack.c.bf16 %v248, %v248
    %v250 = vld [vmem:[%s3] sm:$0xf]
    %v251 = vld [vmem:[%s3 + $0x4] sm:$0xf]
    %v252 = vld [vmem:[%s3 + $0x8] sm:$0xf]
    %v253 = vld [vmem:[%s3 + $0xc] sm:$0xf]
    %v254 = vld [vmem:[%s3 + $0x10] sm:$0xf]
    %v255 = vld [vmem:[%s3 + $0x14] sm:$0xf]
    %v256 = vld [vmem:[%s3 + $0x18] sm:$0xf]
    %v257 = vld [vmem:[%s3 + $0x1c] sm:$0xf]
    %v258 = vld [vmem:[%s3 + $0x20] sm:$0xf]
    %v259 = vld [vmem:[%s3 + $0x24] sm:$0xf]
    %v260 = vld [vmem:[%s3 + $0x28] sm:$0xf]
    %v261 = vld [vmem:[%s3 + $0x2c] sm:$0xf]
    %v262 = vld [vmem:[%s3 + $0x30] sm:$0xf]
    %v263 = vld [vmem:[%s3 + $0x34] sm:$0xf]
    %v264 = vld [vmem:[%s3 + $0x38] sm:$0xf]
    %v265 = vld [vmem:[%s3 + $0x3c] sm:$0xf]
    %v266 = vld [vmem:[%s4] sm:$0x1]
    %v268 = vperm.slane %v266, 0
    %v286 = vunpack.c.l.b16 %v250
    %v287 = vunpack.c.l.b16 %v251
    %v288 = vunpack.c.l.b16 %v252
    %v289 = vunpack.c.l.b16 %v253
    %v290 = vunpack.c.l.b16 %v254
    %v291 = vunpack.c.l.b16 %v255
    %v292 = vunpack.c.l.b16 %v256
    %v293 = vunpack.c.l.b16 %v257
    %v294 = vunpack.c.l.b16 %v258
    %v295 = vunpack.c.l.b16 %v259
    %v296 = vunpack.c.l.b16 %v260
    %v297 = vunpack.c.l.b16 %v261
    %v298 = vunpack.c.l.b16 %v262
    %v299 = vunpack.c.l.b16 %v263
    %v300 = vunpack.c.l.b16 %v264
    %v301 = vunpack.c.l.b16 %v265
    %v302 = vpack.c.b16 %v287, %v286
    %v303 = vpack.c.b16 %v289, %v288
    %v304 = vpack.c.b16 %v291, %v290
    %v305 = vpack.c.b16 %v293, %v292
    %v306 = vpack.c.b16 %v295, %v294
    %v307 = vpack.c.b16 %v297, %v296
    %v308 = vpack.c.b16 %v299, %v298
    %v309 = vpack.c.b16 %v301, %v300
    %318 = vmatpush.bf16.msra.mxu0 %v309
    %319 = vmatpush.bf16.msra.mxu0 %v308
    %320 = vmatpush.bf16.msra.mxu0 %v307
    %321 = vmatpush.bf16.msra.mxu0 %v306
    %322 = vmatpush.bf16.msra.mxu0 %v305
    %323 = vmatpush.bf16.msra.mxu0 %v304
    %324 = vmatpush.bf16.msra.mxu0 %v303
    %325 = vmatpush.bf16.msra.mxu0 %v302
    %326 = vmatmul.bf16.gmra.mxu0 %v249
    %v327 = vpop.f32.mrf.mxu0
    %v328 = vadd.f32 %v268, %v327
    %v329 = vpop.f32.mrf.mxu0
    %330 = vdwg.mxu0
    %vm331 = vcmp.gt.f32.partialorder %v328, 0.0
    %v332 = vmul.f32 %v328, 0.01
    %v333 = vsel %vm331, %v328, %v332
    %v334 = vpack.c.bf16 %v333, %v333
    %v335 = vld [vmem:[%s5] sm:$0xf]
    %v336 = vld [vmem:[%s5 + $0x4] sm:$0xf]
    %v337 = vld [vmem:[%s5 + $0x8] sm:$0xf]
    %v338 = vld [vmem:[%s5 + $0xc] sm:$0xf]
    %v339 = vld [vmem:[%s5 + $0x10] sm:$0xf]
    %v340 = vld [vmem:[%s5 + $0x14] sm:$0xf]
    %v341 = vld [vmem:[%s5 + $0x18] sm:$0xf]
    %v342 = vld [vmem:[%s5 + $0x1c] sm:$0xf]
    %v343 = vld [vmem:[%s6] sm:$0x1]
    %v345 = vperm.slane %v343, 0
    %v355 = vunpack.c.l.b16 %v335
    %v356 = vunpack.c.l.b16 %v336
    %v357 = vunpack.c.l.b16 %v337
    %v358 = vunpack.c.l.b16 %v338
    %v359 = vunpack.c.l.b16 %v339
    %v360 = vunpack.c.l.b16 %v340
    %v361 = vunpack.c.l.b16 %v341
    %v362 = vunpack.c.l.b16 %v342
    %v363 = vpack.c.b16 %v356, %v355
    %v364 = vpack.c.b16 %v358, %v357
    %v365 = vpack.c.b16 %v360, %v359
    %v366 = vpack.c.b16 %v362, %v361
    %vm371 = vcmask 523264
    %v373 = vsel %vm371, %v334, 0
    %375 = vmatpush.bf16.msra.mxu0 0
    %376 = vmatpush.bf16.msra.mxu0 0
    %377 = vmatpush.bf16.msra.mxu0 0
    %378 = vmatpush.bf16.msra.mxu0 0
    %379 = vmatpush.bf16.msra.mxu0 %v366
    %380 = vmatpush.bf16.msra.mxu0 %v365
    %381 = vmatpush.bf16.msra.mxu0 %v364
    %382 = vmatpush.bf16.msra.mxu0 %v363
    %383 = vmatmul.bf16.gmra.mxu0 %v373
    %v384 = vpop.f32.mrf.mxu0
    %v385 = vadd.f32 %v345, %v384
    %v386 = vpop.f32.mrf.mxu0
    %387 = vdwg.mxu0
    %v388 = vmax.f32 %v385, -0.99999
    %v389 = vadd.f32 %v388, 1.0
    %v390 = vlog2.pop %v389
    %v391 = vmul.f32 %v390, 0.6931472
    %v392 = vmul.f32 -0.5, %v388
    %v393 = vadd.f32 %v392, 1.0
    %v394 = vmul.f32 %v393, %v388
    %v395 = vand.u32 2147483647, %v388
    %vm396 = vcmp.lt.f32.partialorder %v395, 0.0004427343
    %v397 = vsel %vm396, %v394, %v391
    %v398 = vmax.f32 %v397, 0.0
    %vm399 = vcmask 15360
    %400 = vst.msk [vmem:[%s7] sm:$0xff] %vm399, %v398
    // Predicated region
    $region34: #{intercropping_mlp_forward.1} parent=1 // pred_check
      _
    $region35: #{intercropping_mlp_forward.1} parent=1 // pred_check_branch
      %402 = sbr.rel (0) target = $region37
    $region36: #{intercropping_mlp_forward.1} parent=1 // pred_region
      _
    $region37: #{intercropping_mlp_forward.1} parent=1 // pred_fallthru
      _
    // Predicated region
    $region38: #{intercropping_mlp_forward.1} parent=1 // pred_check
      _
    $region39: #{intercropping_mlp_forward.1} parent=1 // pred_check_branch
      %404 = sbr.rel (0) target = $region41
    $region40: #{intercropping_mlp_forward.1} parent=1 // pred_region
      _
    $region41: #{intercropping_mlp_forward.1} parent=1 // pred_fallthru
      _
    %405 = vsyncpa [#allocation3], 1

</llo_original>
